<compile_context>
chip_gen: v7x
topology: tpu7x:2x2x1
jax: 0.10.0
libtpu: 0.0.40
codegen_flags: <defaults>
</compile_context>

<pallas_src>
import functools

import jax
import jax.numpy as jnp
from jax.experimental import pallas as pl
from jax.experimental.pallas import tpu as pltpu


def _inv_feature(v, func, eps=1e-4):
    """inv_non_linear_feature_func from the reference (elementwise, VPU/EUP)."""
    if func == 'squared-exponential':
        return -jnp.log(jnp.maximum(v, eps)) * 2.0
    if func == 'tanh':
        v = jnp.clip(v, -1.0 + eps, 1.0 - eps)
        return 0.5 * jnp.log((1.0 + v) / (1.0 - v))   # atanh
    if func == 'elu':
        pos = jnp.where(v >= 0, v, 0.0)
        neg = jnp.where(v < 0, jnp.log(jnp.maximum(v, -1.0 + eps) + 1.0), 0.0)
        return pos + neg
    return v


def _pick_tn(d, tn=None):
    """Output-channel tile width (lane-dense multiple of 128 when possible)."""
    if tn is not None:
        assert d % tn == 0
        return tn
    for t in (512, 256, 128):
        if d % t == 0:
            return t
    return d            # small-d fallback (block == full array satisfies (8,128) rule)


def _pick_tile_n(N, tile_n=None, max_tile=1024):
    """Token tile height: bound VMEM residency for long-prefill shapes."""
    if tile_n is not None:
        assert N % tile_n == 0 and (tile_n % 8 == 0 or tile_n == N)
        return tile_n
    if N <= max_tile:
        return N
    for t in range(max_tile, 7, -1):
        if N % t == 0 and t % 8 == 0:
            return t
    return N            # no clean divisor -> keep full N resident


def prepare_adapter_weights(positive_projection, negative_projection, dtype, tn=None):
    """Build the fused [P_pos^T | P_neg^T] per-block RHS ONCE at weight-load time.

    Block j of the returned (d, 2*d) slab (columns [j*2*tn, (j+1)*2*tn)) is
    [P_pos^T[:, j*tn:(j+1)*tn] | P_neg^T[:, j*tn:(j+1)*tn]], so a single
    BlockSpec window feeds one fused MXU matmul per grid step.
    Returns (pcat, tn).
    """
    d = positive_projection.shape[0]
    assert positive_projection.shape == (d, d)
    assert negative_projection.shape == (d, d)
    tn = _pick_tn(d, tn)
    nb = d // tn
    p_pos = jnp.asarray(positive_projection, dtype=dtype)
    p_neg = jnp.asarray(negative_projection, dtype=dtype)
    pcat = jnp.concatenate(
        [p_pos.T.reshape(d, nb, tn), p_neg.T.reshape(d, nb, tn)], axis=-1,
    ).reshape(d, 2 * d)
    return pcat, tn


def _adapter_kernel(y_ref, pcat_ref, o_ref, *scratch, tn, nb, ns, tile_n,
                    combine, feature_function):
    """One (channel-block j, token-block i) grid step.

    y_ref    : (tile_n, d)   activation rows of this token block
    pcat_ref : (d, 2*tn)     fused [P_pos^T | P_neg^T] columns of channel block j
    o_ref    : (N, tn) for l2_norm (resident across token steps) /
               (tile_n, tn) for 'average'
    scratch  : () or (acc[N,tn] f32, sx[1,tn] f32, sc[1,tn] f32) when streaming l2
    """
    # Single fused MXU matmul for both projections; operands stay in feed dtype,
    # accumulation in f32 via preferred_element_type.
    both = jnp.dot(y_ref[...], pcat_ref[...],
                   preferred_element_type=jnp.float32)          # (tile_n, 2*tn)
    pos = both[:, :tn]
    neg = both[:, tn:]
    if feature_function is not None:
        pos = _inv_feature(pos, feature_function)
        neg = _inv_feature(neg, feature_function)
    combined = pos + neg                                         # (tile_n, tn) f32

    if combine == 'average':
        o_ref[...] = (combined * 0.5).astype(o_ref.dtype)
        return

    # ---- combine == 'l2_norm' ---------------------------------------------
    # Reference: torch.norm over dim=-1 of the (d, N) tensor == per-channel
    # reduction over all N tokens.  Channels are columns here -> reduce axis 0.
    # Input-column norm reuses the already-resident activation block.
    if nb == 1:
        yc = y_ref[...].astype(jnp.float32)                      # tn == d
    else:
        col0 = pl.multiple_of(pl.program_id(0) * tn, 128)        # lane-aligned slice
        yc = y_ref[:, pl.ds(col0, tn)].astype(jnp.float32)
    sx = jnp.sum(yc * yc, axis=0, keepdims=True)                 # (1, tn)
    sc = jnp.sum(combined * combined, axis=0, keepdims=True)     # (1, tn)

    if ns == 1:
        # Whole token range resident: normalize in one shot (rsqrt -> EUP slot).
        scale = jnp.sqrt(sx) * jax.lax.rsqrt(sc + 1e-12)
        o_ref[...] = (combined * scale).astype(o_ref.dtype)
        return

    # Streaming path: accumulate per-channel sums of squares across token steps,
    # stash unnormalized `combined` in an f32 scratch, scale on the last step.
    i = pl.program_id(1)
    acc_ref, sx_ref, sc_ref = scratch

    @pl.when(i == 0)
    def _():
        sx_ref[...] = jnp.zeros_like(sx_ref)
        sc_ref[...] = jnp.zeros_like(sc_ref)

    sx_ref[...] += sx
    sc_ref[...] += sc
    row0 = pl.multiple_of(i * tile_n, 8)
    acc_ref[pl.ds(row0, tile_n), :] = combined

    @pl.when(i == ns - 1)
    def _():
        scale = jnp.sqrt(sx_ref[...]) * jax.lax.rsqrt(sc_ref[...] + 1e-12)
        o_ref[...] = (acc_ref[...] * scale).astype(o_ref.dtype)


def adapter_forward(x, positive_projection=None, negative_projection=None,
                    combine_sea_embeddings='l2_norm', feature_function=None,
                    *, prepared=None, tn=None, tile_n=None, mxu_feed_dtype=None):
    """JAX/Pallas equivalent of AdapterLayer.forward.

    `prepared` = output of prepare_adapter_weights (hoist it out of the hot path);
    if None it is built here from the raw projections.
    `mxu_feed_dtype` (e.g. jnp.bfloat16) optionally narrows the MXU operand dtype
    for f32 inputs; accumulation stays f32.
    """
    if prepared is None and (positive_projection is None or negative_projection is None):
        return x
    assert combine_sea_embeddings in ('l2_norm', 'average')

    input_dtype = x.dtype
    bs, L, d = x.shape
    N = bs * L

    feed_dtype = jnp.dtype(mxu_feed_dtype) if mxu_feed_dtype is not None \
        else jnp.dtype(input_dtype)

    if prepared is None:
        prepared = prepare_adapter_weights(positive_projection, negative_projection,
                                           dtype=feed_dtype, tn=tn)
    pcat, tn = prepared
    assert pcat.shape == (d, 2 * d) and d % tn == 0
    nb = d // tn

    tile_n = _pick_tile_n(N, tile_n)
    ns = N // tile_n

    # Token ordering n = b*L + l: a plain reshape (no relayout copies).  Valid
    # because every op is per-(token, channel) or a full-N reduction.
    y = x.reshape(N, d)
    if y.dtype != feed_dtype:
        y = y.astype(feed_dtype)
    if pcat.dtype != feed_dtype:
        pcat = pcat.astype(feed_dtype)

    kernel = functools.partial(_adapter_kernel, tn=tn, nb=nb, ns=ns, tile_n=tile_n,
                               combine=combine_sea_embeddings,
                               feature_function=feature_function)

    pcat_spec = pl.BlockSpec((d, 2 * tn), lambda j, i: (0, j))
    if combine_sea_embeddings == 'l2_norm':
        # Output channel-block stays VMEM-resident across all token steps.
        out_spec = pl.BlockSpec((N, tn), lambda j, i: (0, j))
        scratch = [] if ns == 1 else [
            pltpu.VMEM((N, tn), jnp.float32),     # unnormalized combined
            pltpu.VMEM((1, tn), jnp.float32),     # sum_N x^2 per channel
            pltpu.VMEM((1, tn), jnp.float32),     # sum_N combined^2 per channel
        ]
    else:
        out_spec = pl.BlockSpec((tile_n, tn), lambda j, i: (i, j))
        scratch = []

    # VMEM budget derived from actual block sizes, capped below physical VMEM.
    item_f = jnp.dtype(feed_dtype).itemsize
    item_o = jnp.dtype(input_dtype).itemsize
    need = (tile_n * d * item_f * (1 if ns == 1 else 2)          # activation block(s)
            + d * 2 * tn * item_f * 2                            # weight blocks (x2 buffers)
            + 3 * tile_n * 2 * tn * 4)                           # f32 intermediates (slack)
    if combine_sea_embeddings == 'l2_norm':
        need += 2 * N * tn * item_o
        if ns > 1:
            need += N * tn * 4 + 2 * tn * 4
    else:
        need += 2 * tile_n * tn * item_o
    try:
        vmem_cap = int(pltpu.get_tpu_info().vmem_capacity_bytes)
    except Exception:                                            # off-TPU / older jax
        vmem_cap = 64 * 1024 * 1024
    vmem_limit = int(min(max(2 * need, 32 * 1024 * 1024), vmem_cap * 7 // 8))

    cost = pl.CostEstimate(
        flops=int(2 * N * d * 2 * d),
        transcendentals=int(2 * N * d) if feature_function else 0,
        bytes_accessed=int(N * d * item_f + 2 * d * d * item_f + N * d * item_o))

    def run(y_spec):
        return pl.pallas_call(
            kernel,
            out_shape=jax.ShapeDtypeStruct((N, d), input_dtype),
            grid_spec=pltpu.PrefetchScalarGridSpec(
                num_scalar_prefetch=0,
                grid=(nb, ns),
                in_specs=[y_spec, pcat_spec],
                out_specs=out_spec,
                scratch_shapes=scratch),
            compiler_params=pltpu.CompilerParams(
                dimension_semantics=("parallel", "arbitrary"),
                vmem_limit_bytes=vmem_limit),
            cost_estimate=cost,
        )(y, pcat)

    y_index_map = lambda j, i: (i, 0)
    if ns == 1:
        # Grid-invariant activation block: single-buffer it (halves the largest
        # VMEM allocation).  Fall back to the default double-buffered spec if
        # this jax version rejects a buffer count of 1; a genuine kernel error
        # would re-raise identically from the fallback call.
        try:
            out_y = run(pl.BlockSpec((tile_n, d), y_index_map,
                                     pipeline_mode=pl.Buffered(1)))
        except Exception:
            out_y = run(pl.BlockSpec((tile_n, d), y_index_map))
    else:
        out_y = run(pl.BlockSpec((tile_n, d), y_index_map))

    return out_y.reshape(bs, L, d).astype(input_dtype)


def _adapter_reference(x, p_pos, p_neg, combine, feature_function):
    """Pure-JAX mirror of the PyTorch forward (original (d, N) layout)."""
    input_dtype = x.dtype
    bs, L, d = x.shape
    x2d = jnp.transpose(x, (2, 1, 0)).reshape(d, L * bs)       # x.T.view(d, L*bs)
    norm = jnp.linalg.norm(x2d.astype(jnp.float32), axis=-1, keepdims=True)
    pos = jnp.dot(p_pos.astype(input_dtype), x2d)
    neg = jnp.dot(p_neg.astype(input_dtype), x2d)
    if feature_function:
        pos = _inv_feature(pos.astype(jnp.float32), feature_function)
        neg = _inv_feature(neg.astype(jnp.float32), feature_function)
    if combine == 'l2_norm':
        c = pos + neg
        norm_x = jnp.linalg.norm(c.astype(jnp.float32), axis=-1, keepdims=True)
        c = c * norm / norm_x
    else:
        c = (pos + neg) / 2.0
    out = jnp.transpose(c.reshape(d, L, bs), (2, 1, 0))
    return out.astype(input_dtype)


if __name__ == "__main__":
    key = jax.random.PRNGKey(0)
    bs, L, d = 2, 8, 256          # small shapes; tn=128 below exercises 2 channel blocks
    k1, k2, k3 = jax.random.split(key, 3)

    x = jax.random.normal(k1, (bs, L, d), dtype=jnp.float32)
    pos_proj = jax.random.normal(k2, (d, d), dtype=jnp.float32) / jnp.sqrt(d)
    neg_proj = jax.random.normal(k3, (d, d), dtype=jnp.float32) / jnp.sqrt(d)

    # Weights fused/transposed ONCE (hoisted out of the per-call path).
    prepared = prepare_adapter_weights(pos_proj, neg_proj, dtype=x.dtype, tn=128)

    # Case 1: l2_norm, no feature fn, 2 channel blocks, single token step.
    out = adapter_forward(x, pos_proj, neg_proj, 'l2_norm', None, prepared=prepared)
    jax.block_until_ready(out)
    ref = _adapter_reference(x, pos_proj, neg_proj, 'l2_norm', None)
    assert out.shape == x.shape and out.dtype == x.dtype
    assert bool(jnp.allclose(out, ref, rtol=1e-2, atol=1e-2))

    # Case 2: average combine.
    out2 = adapter_forward(x, pos_proj, neg_proj, 'average', None, prepared=prepared)
    jax.block_until_ready(out2)
    ref2 = _adapter_reference(x, pos_proj, neg_proj, 'average', None)
    assert bool(jnp.allclose(out2, ref2, rtol=1e-2, atol=1e-2))

    # Case 3: streaming token path (tile_n=8 -> 2 token steps) for l2_norm;
    # exercises the accumulator scratch + finalize-on-last-step pattern.
    out3 = adapter_forward(x, pos_proj, neg_proj, 'l2_norm', None,
                           prepared=prepared, tile_n=8)
    jax.block_until_ready(out3)
    assert bool(jnp.allclose(out3, ref, rtol=1e-2, atol=1e-2))

    # Case 4: l2_norm + squared-exponential inverse feature (log amplification
    # near the eps clamp makes bit-level comparison flaky; smoke-test instead).
    out4 = adapter_forward(x, pos_proj, neg_proj, 'l2_norm', 'squared-exponential',
                           prepared=prepared)
    jax.block_until_ready(out4)
    assert out4.shape == x.shape and bool(jnp.all(jnp.isfinite(out4)))

    # Case 5: 'average' on the streaming path with opt-in bf16 MXU feed.
    out5 = adapter_forward(x, pos_proj, neg_proj, 'average', None,
                           tile_n=8, mxu_feed_dtype=jnp.bfloat16)
    jax.block_until_ready(out5)
    assert bool(jnp.allclose(out5, ref2, rtol=5e-2, atol=5e-2))

    # Case 6: small d (single-block full-array fallback), bf16 operands, tanh.
    xb = x[:, :, :32].astype(jnp.bfloat16)
    pb = pos_proj[:32, :32].astype(jnp.bfloat16)
    ngb = neg_proj[:32, :32].astype(jnp.bfloat16)
    out6 = adapter_forward(xb, pb, ngb, 'l2_norm', 'tanh')
    jax.block_until_ready(out6)
    assert out6.shape == xb.shape and out6.dtype == xb.dtype
    assert bool(jnp.all(jnp.isfinite(out6.astype(jnp.float32))))

    # Case 7: missing projections -> identity (module semantics).
    out7 = adapter_forward(x, None, None)
    assert out7 is x

    print("KERNEL_OK")
</pallas_src>

<mosaic_0001>
module attributes {stable_mosaic.version = 11 : i64} {
  func.func @_adapter_kernel(%arg0: i32, %arg1: i32, %arg2: memref<16x256xf32, #tpu.memory_space<vmem>>, %arg3: memref<256x256xf32, #tpu.memory_space<vmem>>, %arg4: memref<16x128xf32, #tpu.memory_space<vmem>>) attributes {dimension_semantics = [#tpu.dimension_semantics<parallel>, #tpu.dimension_semantics<arbitrary>], iteration_bounds = array<i64: 2, 1>, scalar_prefetch = 0 : i64, scratch_operands = 0 : i64, tpu.core_type = #tpu.core_type<tc>, window_params = [{pipeline_mode = #tpu.pipeline_mode<synchronous>, transform_indices = @transform_0, window_bounds = array<i64: 16, 256>}, {transform_indices = @transform_1, window_bounds = array<i64: 256, 256>}, {transform_indices = @transform_2, window_bounds = array<i64: 16, 128>}]} {
    %c0 = arith.constant 0 : index
    %c0_0 = arith.constant 0 : index
    %0 = vector.load %arg2[%c0, %c0_0] : memref<16x256xf32, #tpu.memory_space<vmem>>, vector<16x256xf32>
    %c0_1 = arith.constant 0 : index
    %c0_2 = arith.constant 0 : index
    %1 = vector.load %arg3[%c0_1, %c0_2] : memref<256x256xf32, #tpu.memory_space<vmem>>, vector<256x256xf32>
    %cst = arith.constant dense<0.000000e+00> : vector<16x256xf32>
    %2 = tpu.matmul %0, %1, %cst {dimension_numbers = #tpu.dot_dimension_numbers<[1], [0], [0], [1], [0, 0, 1, 1], [], []>} : vector<16x256xf32>, vector<256x256xf32>, vector<16x256xf32> -> vector<16x256xf32>
    %3 = vector.extract_strided_slice %2 {offsets = [0, 0], sizes = [16, 128], strides = [1, 1]} : vector<16x256xf32> to vector<16x128xf32>
    %4 = vector.extract_strided_slice %2 {offsets = [0, 128], sizes = [16, 128], strides = [1, 1]} : vector<16x256xf32> to vector<16x128xf32>
    %5 = arith.addf %3, %4 : vector<16x128xf32>
    %c128_i32 = arith.constant 128 : i32
    %6 = arith.muli %arg0, %c128_i32 : i32
    %7 = tpu.assume_multiple %6, 128 : i32
    %c0_3 = arith.constant 0 : index
    %8 = arith.index_cast %7 : i32 to index
    %9 = vector.load %arg2[%c0_3, %8] : memref<16x256xf32, #tpu.memory_space<vmem>>, vector<16x128xf32>
    %10 = arith.mulf %9, %9 : vector<16x128xf32>
    %cst_4 = arith.constant dense<0.000000e+00> : vector<128xf32>
    %11 = vector.multi_reduction <add>, %10, %cst_4 [0] : vector<16x128xf32> to vector<128xf32>
    %12 = vector.shape_cast %11 : vector<128xf32> to vector<1x128xf32>
    %13 = arith.mulf %5, %5 : vector<16x128xf32>
    %cst_5 = arith.constant dense<0.000000e+00> : vector<128xf32>
    %14 = vector.multi_reduction <add>, %13, %cst_5 [0] : vector<16x128xf32> to vector<128xf32>
    %15 = vector.shape_cast %14 : vector<128xf32> to vector<1x128xf32>
    %16 = math.sqrt %12 : vector<1x128xf32>
    %cst_6 = arith.constant 9.99999996E-13 : f32
    %17 = vector.broadcast %cst_6 : f32 to vector<1x128xf32>
    %18 = arith.addf %15, %17 : vector<1x128xf32>
    %19 = math.rsqrt %18 : vector<1x128xf32>
    %20 = arith.mulf %16, %19 : vector<1x128xf32>
    %21 = vector.broadcast %20 : vector<1x128xf32> to vector<16x128xf32>
    %22 = arith.mulf %5, %21 : vector<16x128xf32>
    %c0_7 = arith.constant 0 : index
    %c0_8 = arith.constant 0 : index
    %23 = vector.load %arg4[%c0_7, %c0_8] : memref<16x128xf32, #tpu.memory_space<vmem>>, vector<16x128xf32>
    tpu.vector_store %arg4[%c0_7, %c0_8], %22 {strides = array<i32>} : memref<16x128xf32, #tpu.memory_space<vmem>>, vector<16x128xf32>,
    return
  }
  func.func @transform_0(%arg0: i32, %arg1: i32) -> (i32, i32) {
    %c0_i32 = arith.constant 0 : i32
    %c0_i32_0 = arith.constant 0 : i32
    return %arg1, %c0_i32 : i32, i32
  }
  func.func @transform_1(%arg0: i32, %arg1: i32) -> (i32, i32) {
    %c0_i32 = arith.constant 0 : i32
    %c0_i32_0 = arith.constant 0 : i32
    return %c0_i32, %arg0 : i32, i32
  }
  func.func @transform_2(%arg0: i32, %arg1: i32) -> (i32, i32) {
    %c0_i32 = arith.constant 0 : i32
    %c0_i32_0 = arith.constant 0 : i32
    return %c0_i32, %arg0 : i32, i32
  }
}

module attributes {stable_mosaic.version = 11 : i64} {
  func.func @_adapter_kernel(%arg0: i32, %arg1: i32, %arg2: memref<16x256xf32, #tpu.memory_space<vmem>>, %arg3: memref<256x256xf32, #tpu.memory_space<vmem>>, %arg4: memref<16x128xf32, #tpu.memory_space<vmem>>) attributes {dimension_semantics = [#tpu.dimension_semantics<parallel>, #tpu.dimension_semantics<arbitrary>], iteration_bounds = array<i64: 2, 1>, scalar_prefetch = 0 : i64, scratch_operands = 0 : i64, tpu.core_type = #tpu.core_type<tc>, window_params = [{transform_indices = @transform_0, window_bounds = array<i64: 16, 256>}, {transform_indices = @transform_1, window_bounds = array<i64: 256, 256>}, {transform_indices = @transform_2, window_bounds = array<i64: 16, 128>}]} {
    %c0 = arith.constant 0 : index
    %c0_0 = arith.constant 0 : index
    %0 = vector.load %arg2[%c0, %c0_0] : memref<16x256xf32, #tpu.memory_space<vmem>>, vector<16x256xf32>
    %c0_1 = arith.constant 0 : index
    %c0_2 = arith.constant 0 : index
    %1 = vector.load %arg3[%c0_1, %c0_2] : memref<256x256xf32, #tpu.memory_space<vmem>>, vector<256x256xf32>
    %cst = arith.constant dense<0.000000e+00> : vector<16x256xf32>
    %2 = tpu.matmul %0, %1, %cst {dimension_numbers = #tpu.dot_dimension_numbers<[1], [0], [0], [1], [0, 0, 1, 1], [], []>} : vector<16x256xf32>, vector<256x256xf32>, vector<16x256xf32> -> vector<16x256xf32>
    %3 = vector.extract_strided_slice %2 {offsets = [0, 0], sizes = [16, 128], strides = [1, 1]} : vector<16x256xf32> to vector<16x128xf32>
    %4 = vector.extract_strided_slice %2 {offsets = [0, 128], sizes = [16, 128], strides = [1, 1]} : vector<16x256xf32> to vector<16x128xf32>
    %5 = arith.addf %3, %4 : vector<16x128xf32>
    %c128_i32 = arith.constant 128 : i32
    %6 = arith.muli %arg0, %c128_i32 : i32
    %7 = tpu.assume_multiple %6, 128 : i32
    %c0_3 = arith.constant 0 : index
    %8 = arith.index_cast %7 : i32 to index
    %9 = vector.load %arg2[%c0_3, %8] : memref<16x256xf32, #tpu.memory_space<vmem>>, vector<16x128xf32>
    %10 = arith.mulf %9, %9 : vector<16x128xf32>
    %cst_4 = arith.constant dense<0.000000e+00> : vector<128xf32>
    %11 = vector.multi_reduction <add>, %10, %cst_4 [0] : vector<16x128xf32> to vector<128xf32>
    %12 = vector.shape_cast %11 : vector<128xf32> to vector<1x128xf32>
    %13 = arith.mulf %5, %5 : vector<16x128xf32>
    %cst_5 = arith.constant dense<0.000000e+00> : vector<128xf32>
    %14 = vector.multi_reduction <add>, %13, %cst_5 [0] : vector<16x128xf32> to vector<128xf32>
    %15 = vector.shape_cast %14 : vector<128xf32> to vector<1x128xf32>
    %16 = math.sqrt %12 : vector<1x128xf32>
    %cst_6 = arith.constant 9.99999996E-13 : f32
    %17 = vector.broadcast %cst_6 : f32 to vector<1x128xf32>
    %18 = arith.addf %15, %17 : vector<1x128xf32>
    %19 = math.rsqrt %18 : vector<1x128xf32>
    %20 = arith.mulf %16, %19 : vector<1x128xf32>
    %21 = vector.broadcast %20 : vector<1x128xf32> to vector<16x128xf32>
    %22 = arith.mulf %5, %21 : vector<16x128xf32>
    %c0_7 = arith.constant 0 : index
    %c0_8 = arith.constant 0 : index
    %23 = vector.load %arg4[%c0_7, %c0_8] : memref<16x128xf32, #tpu.memory_space<vmem>>, vector<16x128xf32>
    tpu.vector_store %arg4[%c0_7, %c0_8], %22 {strides = array<i32>} : memref<16x128xf32, #tpu.memory_space<vmem>>, vector<16x128xf32>,
    return
  }
  func.func @transform_0(%arg0: i32, %arg1: i32) -> (i32, i32) {
    %c0_i32 = arith.constant 0 : i32
    %c0_i32_0 = arith.constant 0 : i32
    return %arg1, %c0_i32 : i32, i32
  }
  func.func @transform_1(%arg0: i32, %arg1: i32) -> (i32, i32) {
    %c0_i32 = arith.constant 0 : i32
    %c0_i32_0 = arith.constant 0 : i32
    return %c0_i32, %arg0 : i32, i32
  }
  func.func @transform_2(%arg0: i32, %arg1: i32) -> (i32, i32) {
    %c0_i32 = arith.constant 0 : i32
    %c0_i32_0 = arith.constant 0 : i32
    return %c0_i32, %arg0 : i32, i32
  }
}

</mosaic_0001>

<llo_original>
// kernel: tpu_custom_call.1
$region0: #{tpu_custom_call.1}
  #allocation0 [shape = 'u32[]', space=smem, size = 0x4, offset = 0x4, fixed_abs, tag = 'smem constant byte address 0x4 - core index']
  #allocation1 [shape = 'u32[144,128]{1,0:T(1,128)}', space=vmem, size = 0x12000, scoped, tag = 'internal scratch']
  %s0 = inlined_call_operand.hbm [shape: f32[16,256], index: 0, kind: input, shape index: {}]
  %s1 = inlined_call_operand.hbm [shape: f32[256,512], index: 1, kind: input, shape index: {}]
  %s2 = inlined_call_operand.hbm [shape: f32[16,256], index: 2, kind: output, shape index: {}]
  %s3 = sld [smem:[#allocation0]]
  $region49: #{tpu_custom_call.1} parent=0
    _
  %s5 = ssub.s32 1, %s3
  %s6 = scalar_select 0, %s5, %s3
  $region1: #{tpu_custom_call.1} parent=0
    #allocation2 [shape = 'u8[16384]{0}', space=vmem, size = 0x4000, scoped, tag = 'input window, operand 0, single buffered']
    #allocation3 [shape = 's32[2]{0}', space=sflag, size = 0x8, scoped, tag = 'scoped memory for tpu_custom_call.1']
    #allocation4 [shape = 's32[2]{0}', space=sflag, size = 0x8, scoped, tag = 'scoped memory for tpu_custom_call.1']
    #allocation5 [shape = 'u8[524288]{0}', space=vmem, size = 0x80000, scoped, tag = 'input window, operand 1']
    #allocation6 [shape = 's32[2]{0}', space=sflag, size = 0x8, scoped, tag = 'scoped memory for tpu_custom_call.1']
    #allocation7 [shape = 'u8[16384]{0}', space=vmem, size = 0x4000, scoped, tag = 'output window, operand 0']
    %7 = vsyncpa [#allocation3], 0
    %8 = vsyncpa [#allocation6], 0
    %s9 = scalar_lea.sflag [#allocation6], 1
    %10 = vsyncpa %s9, 0
    %11 = vsyncpa [#allocation4], 0
    %s12 = scalar_lea.sflag [#allocation4], 1
    %13 = vsyncpa %s12, 0
    loop: start=0, step=1, limit=4
    $region2: #{tpu_custom_call.1} parent=1 // loop_pre_header
      _
    $region3: #{tpu_custom_call.1} parent=1 // loop_header
      %s15 = sphi 0, %s19
      %p16 = scmp.ge.s32.totalorder %s15, 4
      %s22 = sphi 0, %s34
      %s23 = sphi 0, %s30
      %s24 = sphi 0, %s22
      %s25 = sphi 0, %s23
      %s26 = sphi 0, %s24
      %s27 = sphi 0, %s25
      %s37 = sphi 0, %s39
      %s40 = sphi 0, %s37
      %s41 = sphi 0, %s40
      %s57 = sphi 0, %s41
      %s63 = sphi 0, %s65
      %s66 = sphi 0, %s63
      %s67 = sphi 0, %s66
      %s83 = sphi 0, %s67
      %s89 = sphi 0, %s91
      %s92 = sphi 0, %s89
      %s93 = sphi 0, %s92
      %s109 = sphi 0, %s93
    $region4: #{tpu_custom_call.1} parent=1 // loop_header_branch
      %18 = sbr.rel (%p16) target = $region8
    $region5: #{tpu_custom_call.1} parent=1 // loop_body
      %s20 = ssub.s32 %s15, 1
      %s21 = ssub.s32 %s15, 2
      %s28 = sadd.s32 1, %s23
      %p29 = scmp.ge.s32.totalorder %s28, 1
      %s30 = scalar_select %p29, 0, %s28
      %s31 = sadd.s32 1, %s22
      %s32 = scalar_select %p29, %s31, %s22
      %p33 = scmp.ge.s32.totalorder %s32, 2
      %s34 = scalar_select %p33, 0, %s32
      %s35 = ssub.s32 %s23, %s30
      %p36 = scmp.eq.s32.totalorder %s35, 0
      %s38 = sadd.s32 %s37, 1
      %s39 = scalar_select %p36, %s37, %s38
      %p42 = pneg %p36
      %p43 = scmp.eq.s32.totalorder %s15, 1
      %p44 = por %p42, %p43
      %p45 = scmp.ne.s32.totalorder %s37, %s40
      %p46 = scmp.eq.s32.totalorder %s15, 0
      %p47 = por %p45, %p46
      %p48 = scmp.ne.s32.totalorder %s37, %s40
      %p49 = scmp.eq.s32.totalorder %s20, 1
      %p50 = por %p48, %p49
      %p51 = scmp.ne.s32.totalorder %s40, %s41
      %p52 = scmp.eq.s32.totalorder %s20, 0
      %p53 = por %p51, %p52
      %p54 = scmp.ne.s32.totalorder %s40, %s41
      %p55 = scmp.eq.s32.totalorder %s21, 1
      %p56 = por %p54, %p55
      %p58 = scmp.ne.s32.totalorder %s41, %s57
      %p59 = scmp.eq.s32.totalorder %s21, 0
      %p60 = por %p58, %p59
      %s61 = ssub.s32 %s22, %s34
      %p62 = scmp.eq.s32.totalorder %s61, 0
      %s64 = sadd.s32 %s63, 1
      %s65 = scalar_select %p62, %s63, %s64
      %p68 = pneg %p62
      %p69 = scmp.eq.s32.totalorder %s15, 1
      %p70 = por %p68, %p69
      %p71 = scmp.ne.s32.totalorder %s63, %s66
      %p72 = scmp.eq.s32.totalorder %s15, 0
      %p73 = por %p71, %p72
      %p74 = scmp.ne.s32.totalorder %s63, %s66
      %p75 = scmp.eq.s32.totalorder %s20, 1
      %p76 = por %p74, %p75
      %p77 = scmp.ne.s32.totalorder %s66, %s67
      %p78 = scmp.eq.s32.totalorder %s20, 0
      %p79 = por %p77, %p78
      %p80 = scmp.ne.s32.totalorder %s66, %s67
      %p81 = scmp.eq.s32.totalorder %s21, 1
      %p82 = por %p80, %p81
      %p84 = scmp.ne.s32.totalorder %s67, %s83
      %p85 = scmp.eq.s32.totalorder %s21, 0
      %p86 = por %p84, %p85
      %s87 = ssub.s32 %s22, %s34
      %p88 = scmp.eq.s32.totalorder %s87, 0
      %s90 = sadd.s32 %s89, 1
      %s91 = scalar_select %p88, %s89, %s90
      %p94 = pneg %p88
      %p95 = scmp.eq.s32.totalorder %s15, 1
      %p96 = por %p94, %p95
      %p97 = scmp.ne.s32.totalorder %s89, %s92
      %p98 = scmp.eq.s32.totalorder %s15, 0
      %p99 = por %p97, %p98
      %p100 = scmp.ne.s32.totalorder %s89, %s92
      %p101 = scmp.eq.s32.totalorder %s20, 1
      %p102 = por %p100, %p101
      %p103 = scmp.ne.s32.totalorder %s92, %s93
      %p104 = scmp.eq.s32.totalorder %s20, 0
      %p105 = por %p103, %p104
      %p106 = scmp.ne.s32.totalorder %s92, %s93
      %p107 = scmp.eq.s32.totalorder %s21, 1
      %p108 = por %p106, %p107
      %p110 = scmp.ne.s32.totalorder %s93, %s109
      %p111 = scmp.eq.s32.totalorder %s21, 0
      %p112 = por %p110, %p111
      %p113 = scmp.le.s32.totalorder 1, %s15
      %p114 = scmp.lt.s32.totalorder %s15, 3
      %p115 = pnand %p113, %p114
      %p116 = pneg %p115
      // Predicated region
      $region9: #{tpu_custom_call.1} parent=5 // pred_check
        _
      $region10: #{tpu_custom_call.1} parent=5 // pred_check_branch
        %118 = sbr.rel (%p115) target = $region12
      $region11: #{tpu_custom_call.1} parent=5 // pred_region
        %s119 = ssub.s32 %s15, 1
        // Predicated region
        $region13: #{tpu_custom_call.1} parent=11 // pred_check
          %p120 = pneg %p53
        $region14: #{tpu_custom_call.1} parent=11 // pred_check_branch
          %122 = sbr.rel (%p120) target = $region16
        $region15: #{tpu_custom_call.1} parent=11 // pred_region
          %s123 = smul.u32 2, %s25
          %s125 = ssub.s32 512, 512
          %126 = vsyncadd [#allocation3], %s125
          %s127 = smul.addr %s123, 2
          %s128 = smul.addr %s127, 128
          %s129 = scalar_lea.hbm %s0, %s128
          %s130 = sshll.u32 [#allocation2], 4
          %s131 = int_to_ptr.vmem [resolvable:$true] %s130
          %136 = dma.hbm_to_vmem [thread:$0]  %s129, 512, %s131, [#allocation3], 256, 256, 16
        $region16: #{tpu_custom_call.1} parent=11 // pred_fallthru
          _
      $region12: #{tpu_custom_call.1} parent=5 // pred_fallthru
        _
      %p137 = scmp.lt.s32.totalorder %s15, 2
      // Predicated region
      $region17: #{tpu_custom_call.1} parent=5 // pred_check
        %p138 = pneg %p137
      $region18: #{tpu_custom_call.1} parent=5 // pred_check_branch
        %140 = sbr.rel (%p138) target = $region20
      $region19: #{tpu_custom_call.1} parent=5 // pred_region
        // Predicated region
        $region21: #{tpu_custom_call.1} parent=19 // pred_check
          %p141 = pneg %p73
        $region22: #{tpu_custom_call.1} parent=19 // pred_check_branch
          %143 = sbr.rel (%p141) target = $region24
        $region23: #{tpu_custom_call.1} parent=19 // pred_region
          %s144 = sand.u32 %s63, 1
          %s145 = scalar_lea.sflag [#allocation6], %s144
          %s146 = sand.u32 %s63, 1
          %s147 = smul.addr %s146, 512
          %s148 = scalar_lea.vmem [#allocation5], %s147
          %s149 = smul.u32 2, %s22
          %s151 = ssub.s32 8192, 8192
          %152 = vsyncadd %s145, %s151
          %s153 = smul.addr %s149, 128
          %s154 = scalar_lea.hbm %s1, %s153
          %s155 = sshll.u32 %s148, 4
          %s156 = int_to_ptr.vmem [resolvable:$true] %s155
          %161 = dma.hbm_to_vmem [thread:$0]  %s154, 8192, %s156, %s145, 512, 256, 16
        $region24: #{tpu_custom_call.1} parent=19 // pred_fallthru
          _
      $region20: #{tpu_custom_call.1} parent=5 // pred_fallthru
        _
      %p162 = scmp.le.s32.totalorder 1, %s15
      %p163 = scmp.lt.s32.totalorder %s15, 3
      %p164 = pnand %p162, %p163
      %p165 = pneg %p164
      // Predicated region
      $region25: #{tpu_custom_call.1} parent=5 // pred_check
        _
      $region26: #{tpu_custom_call.1} parent=5 // pred_check_branch
        %167 = sbr.rel (%p164) target = $region28
      $region27: #{tpu_custom_call.1} parent=5 // pred_region
        %s168 = ssub.s32 %s15, 1
        // Predicated region
        $region29: #{tpu_custom_call.1} parent=27 // pred_check
          %p169 = pneg %p53
        $region30: #{tpu_custom_call.1} parent=27 // pred_check_branch
          %171 = sbr.rel (%p169) target = $region32
        $region31: #{tpu_custom_call.1} parent=27 // pred_region
          %172 = dma.done [#allocation3], 512
        $region32: #{tpu_custom_call.1} parent=27 // pred_fallthru
          _
        %s173 = sand.u32 %s66, 1
        %s174 = scalar_lea.sflag [#allocation6], %s173
        %s175 = sand.u32 %s66, 1
        %s176 = smul.addr %s175, 512
        %s177 = scalar_lea.vmem [#allocation5], %s176
        // Predicated region
        $region33: #{tpu_custom_call.1} parent=27 // pred_check
          %p178 = pneg %p79
        $region34: #{tpu_custom_call.1} parent=27 // pred_check_branch
          %180 = sbr.rel (%p178) target = $region36
        $region35: #{tpu_custom_call.1} parent=27 // pred_region
          %181 = dma.done %s174, 8192
        $region36: #{tpu_custom_call.1} parent=27 // pred_fallthru
          _
        %p182 = pneg %p53
        %p183 = pneg %p50
        %s184 = sand.u32 %s66, 1
        %s185 = scalar_lea.sflag [#allocation6], %s184
        %s186 = sand.u32 %s66, 1
        %s187 = smul.addr %s186, 512
        %s188 = scalar_lea.vmem [#allocation5], %s187
        %p189 = pneg %p79
        %p190 = pneg %p76
        %p191 = pneg %p105
        %p192 = pneg %p102
        %s193 = sand.u32 %s92, 1
        %s194 = scalar_lea.sflag [#allocation4], %s193
        %s195 = sand.u32 %s92, 1
        %s196 = smul.addr %s195, 16
        %s197 = scalar_lea.vmem [#allocation7], %s196
        %s198 = smul.u32 2, %s25
        %s199 = smul.u32 2, %s24
        %v200 = vld [vmem:[#allocation2] sm:$0xff]
        %v201 = vld [vmem:[#allocation2 + $0x8] sm:$0xff]
        %v202 = vld [vmem:[#allocation2 + $0x10] sm:$0xff]
        %v203 = vld [vmem:[#allocation2 + $0x18] sm:$0xff]
        %v204 = vld [vmem:[%s177] sm:$0xff]
        %v205 = vld [vmem:[%s177 + $0x8] sm:$0xff]
        %v206 = vld [vmem:[%s177 + $0x10] sm:$0xff]
        %v207 = vld [vmem:[%s177 + $0x18] sm:$0xff]
        %v208 = vld [vmem:[%s177 + $0x20] sm:$0xff]
        %v209 = vld [vmem:[%s177 + $0x28] sm:$0xff]
        %v210 = vld [vmem:[%s177 + $0x30] sm:$0xff]
        %v211 = vld [vmem:[%s177 + $0x38] sm:$0xff]
        %v212 = vld [vmem:[%s177 + $0x40] sm:$0xff]
        %v213 = vld [vmem:[%s177 + $0x48] sm:$0xff]
        %v214 = vld [vmem:[%s177 + $0x50] sm:$0xff]
        %v215 = vld [vmem:[%s177 + $0x58] sm:$0xff]
        %v216 = vld [vmem:[%s177 + $0x60] sm:$0xff]
        %v217 = vld [vmem:[%s177 + $0x68] sm:$0xff]
        %v218 = vld [vmem:[%s177 + $0x70] sm:$0xff]
        %v219 = vld [vmem:[%s177 + $0x78] sm:$0xff]
        %v220 = vld [vmem:[%s177 + $0x80] sm:$0xff]
        %v221 = vld [vmem:[%s177 + $0x88] sm:$0xff]
        %v222 = vld [vmem:[%s177 + $0x90] sm:$0xff]
        %v223 = vld [vmem:[%s177 + $0x98] sm:$0xff]
        %v224 = vld [vmem:[%s177 + $0xa0] sm:$0xff]
        %v225 = vld [vmem:[%s177 + $0xa8] sm:$0xff]
        %v226 = vld [vmem:[%s177 + $0xb0] sm:$0xff]
        %v227 = vld [vmem:[%s177 + $0xb8] sm:$0xff]
        %v228 = vld [vmem:[%s177 + $0xc0] sm:$0xff]
        %v229 = vld [vmem:[%s177 + $0xc8] sm:$0xff]
        %v230 = vld [vmem:[%s177 + $0xd0] sm:$0xff]
        %v231 = vld [vmem:[%s177 + $0xd8] sm:$0xff]
        %v232 = vld [vmem:[%s177 + $0xe0] sm:$0xff]
        %v233 = vld [vmem:[%s177 + $0xe8] sm:$0xff]
        %v234 = vld [vmem:[%s177 + $0xf0] sm:$0xff]
        %v235 = vld [vmem:[%s177 + $0xf8] sm:$0xff]
        %v236 = vld [vmem:[%s177 + $0x100] sm:$0xff]
        %v237 = vld [vmem:[%s177 + $0x108] sm:$0xff]
        %v238 = vld [vmem:[%s177 + $0x110] sm:$0xff]
        %v239 = vld [vmem:[%s177 + $0x118] sm:$0xff]
        %v240 = vld [vmem:[%s177 + $0x120] sm:$0xff]
        %v241 = vld [vmem:[%s177 + $0x128] sm:$0xff]
        %v242 = vld [vmem:[%s177 + $0x130] sm:$0xff]
        %v243 = vld [vmem:[%s177 + $0x138] sm:$0xff]
        %v244 = vld [vmem:[%s177 + $0x140] sm:$0xff]
        %v245 = vld [vmem:[%s177 + $0x148] sm:$0xff]
        %v246 = vld [vmem:[%s177 + $0x150] sm:$0xff]
        %v247 = vld [vmem:[%s177 + $0x158] sm:$0xff]
        %v248 = vld [vmem:[%s177 + $0x160] sm:$0xff]
        %v249 = vld [vmem:[%s177 + $0x168] sm:$0xff]
        %v250 = vld [vmem:[%s177 + $0x170] sm:$0xff]
        %v251 = vld [vmem:[%s177 + $0x178] sm:$0xff]
        %v252 = vld [vmem:[%s177 + $0x180] sm:$0xff]
        %v253 = vld [vmem:[%s177 + $0x188] sm:$0xff]
        %v254 = vld [vmem:[%s177 + $0x190] sm:$0xff]
        %v255 = vld [vmem:[%s177 + $0x198] sm:$0xff]
        %v256 = vld [vmem:[%s177 + $0x1a0] sm:$0xff]
        %v257 = vld [vmem:[%s177 + $0x1a8] sm:$0xff]
        %v258 = vld [vmem:[%s177 + $0x1b0] sm:$0xff]
        %v259 = vld [vmem:[%s177 + $0x1b8] sm:$0xff]
        %v260 = vld [vmem:[%s177 + $0x1c0] sm:$0xff]
        %v261 = vld [vmem:[%s177 + $0x1c8] sm:$0xff]
        %v262 = vld [vmem:[%s177 + $0x1d0] sm:$0xff]
        %v263 = vld [vmem:[%s177 + $0x1d8] sm:$0xff]
        %v264 = vld [vmem:[%s177 + $0x1e0] sm:$0xff]
        %v265 = vld [vmem:[%s177 + $0x1e8] sm:$0xff]
        %v266 = vld [vmem:[%s177 + $0x1f0] sm:$0xff]
        %v267 = vld [vmem:[%s177 + $0x1f8] sm:$0xff]
        %268 = vmatprep.subr.mxu0 %v205
        %269 = vmatpush1.msra.mxu0 %v204
        %270 = vmatprep.subr.mxu0 %v207
        %271 = vmatpush1.msra.mxu0 %v206
        %272 = vmatprep.subr.mxu0 %v209
        %273 = vmatpush1.msra.mxu0 %v208
        %274 = vmatprep.subr.mxu0 %v211
        %275 = vmatpush1.msra.mxu0 %v210
        %276 = vmatprep.subr.mxu0 %v213
        %277 = vmatpush1.msra.mxu0 %v212
        %278 = vmatprep.subr.mxu0 %v215
        %279 = vmatpush1.msra.mxu0 %v214
        %280 = vmatprep.subr.mxu0 %v217
        %281 = vmatpush1.msra.mxu0 %v216
        %282 = vmatprep.subr.mxu0 %v219
        %283 = vmatpush1.msra.mxu0 %v218
        %284 = vmatprep.subr.mxu0 %v221
        %285 = vmatpush1.msra.mxu0 %v220
        %286 = vmatprep.subr.mxu0 %v223
        %287 = vmatpush1.msra.mxu0 %v222
        %288 = vmatprep.subr.mxu0 %v225
        %289 = vmatpush1.msra.mxu0 %v224
        %290 = vmatprep.subr.mxu0 %v227
        %291 = vmatpush1.msra.mxu0 %v226
        %292 = vmatprep.subr.mxu0 %v229
        %293 = vmatpush1.msra.mxu0 %v228
        %294 = vmatprep.subr.mxu0 %v231
        %295 = vmatpush1.msra.mxu0 %v230
        %296 = vmatprep.subr.mxu0 %v233
        %297 = vmatpush1.msra.mxu0 %v232
        %298 = vmatprep.subr.mxu0 %v235
        %299 = vmatpush1.msra.mxu0 %v234
        %300 = vmatprep.subr.mxu0 %v237
        %301 = vmatpush1.msra.mxu0 %v236
        %302 = vmatprep.subr.mxu0 %v239
        %303 = vmatpush1.msra.mxu0 %v238
        %304 = vmatprep.subr.mxu0 %v241
        %305 = vmatpush1.msra.mxu0 %v240
        %306 = vmatprep.subr.mxu0 %v243
        %307 = vmatpush1.msra.mxu0 %v242
        %308 = vmatprep.subr.mxu0 %v245
        %309 = vmatpush1.msra.mxu0 %v244
        %310 = vmatprep.subr.mxu0 %v247
        %311 = vmatpush1.msra.mxu0 %v246
        %312 = vmatprep.subr.mxu0 %v249
        %313 = vmatpush1.msra.mxu0 %v248
        %314 = vmatprep.subr.mxu0 %v251
        %315 = vmatpush1.msra.mxu0 %v250
        %316 = vmatprep.subr.mxu0 %v253
        %317 = vmatpush1.msra.mxu0 %v252
        %318 = vmatprep.subr.mxu0 %v255
        %319 = vmatpush1.msra.mxu0 %v254
        %320 = vmatprep.subr.mxu0 %v257
        %321 = vmatpush1.msra.mxu0 %v256
        %322 = vmatprep.subr.mxu0 %v259
        %323 = vmatpush1.msra.mxu0 %v258
        %324 = vmatprep.subr.mxu0 %v261
        %325 = vmatpush1.msra.mxu0 %v260
        %326 = vmatprep.subr.mxu0 %v263
        %327 = vmatpush1.msra.mxu0 %v262
        %328 = vmatprep.subr.mxu0 %v265
        %329 = vmatpush1.msra.mxu0 %v264
        %330 = vmatprep.subr.mxu0 %v267
        %331 = vmatpush1.msra.mxu0 %v266
        %332 = vmatprep.mubr.f32.mxu0 %v201
        %333 = vmatmul.mubr.f32.gmra.mrb[0].mxu0 %v200
        %v334 = vpop.f32.mrb[0].mxu0
        %v335 = vadd.f32 0.0, %v334
        %v336 = vpop.f32.mrb[0].mxu0
        %v337 = vadd.f32 0.0, %v336
        %338 = vmatprep.mubr.f32.mxu0 %v203
        %339 = vmatmul.mubr.f32.gmra.mrb[0].mxu0 %v202
        %v340 = vpop.f32.mrb[0].mxu0
        %v341 = vadd.f32 0.0, %v340
        %v342 = vpop.f32.mrb[0].mxu0
        %v343 = vadd.f32 0.0, %v342
        %344 = vdwg.mxu0
        %v345 = vadd.f32 %v335, %v337
        %v346 = vadd.f32 %v341, %v343
        %s347 = smul.u32 %s24, 128
        %s348 = sshra.s32 %s347, 7
        %s349 = sand.u32 %s347, 127
        %s350 = smul.addr %s348, 8
        %s351 = scalar_lea.vmem [#allocation2], %s350
        %v352 = vld [vmem:[%s351] sm:$0xff]
        %v353 = vld [vmem:[%s351 + $0x10] sm:$0xff]
        %v354 = vmul.f32 %v352, %v352
        %v355 = vmul.f32 %v353, %v353
        %v356 = vadd.f32 %v354, %v355
        %v357 = vrot.slane %v356, 4
        %v358 = vadd.f32 %v356, %v357
        %v359 = vrot.slane %v358, 2
        %v360 = vadd.f32 %v358, %v359
        %v361 = vrot.slane %v360, 1
        %v362 = vadd.f32 %v360, %v361
        %v363 = vmul.f32 %v345, %v345
        %v364 = vmul.f32 %v346, %v346
        %v365 = vadd.f32 %v363, %v364
        %v366 = vrot.slane %v365, 4
        %v367 = vadd.f32 %v365, %v366
        %v368 = vrot.slane %v367, 2
        %v369 = vadd.f32 %v367, %v368
        %v370 = vrot.slane %v369, 1
        %v371 = vadd.f32 %v369, %v370
        %v372 = vrsqrt.pop %v362
        %v373 = vmul.f32 %v362, %v372
        %vm374 = vcmp.eq.f32.partialorder %v362, inf
        %v375 = vsel %vm374, %v362, %v373
        %vm376 = vcmp.eq.f32.partialorder %v362, 0.0
        %v377 = vand.u32 %v362, 2147483648
        %v378 = vsel %vm376, %v377, %v375
        %v379 = vadd.f32 %v371, 1e-12
        %v380 = vrsqrt.pop %v379
        %v381 = vmul.f32 %v378, %v380
        %v382 = vmul.f32 %v345, %v381
        %v383 = vmul.f32 %v346, %v381
        %384 = vst [vmem:[%s197] sm:$0xff] %v382
        %385 = vst [vmem:[%s197 + $0x8] sm:$0xff] %v383
        %s386 = sand.u32 %s92, 1
        %s387 = scalar_lea.sflag [#allocation4], %s386
        %s388 = sand.u32 %s92, 1
        %s389 = smul.addr %s388, 16
        %s390 = scalar_lea.vmem [#allocation7], %s389
        // Predicated region
        $region37: #{tpu_custom_call.1} parent=27 // pred_check
          %p391 = pneg %p102
        $region38: #{tpu_custom_call.1} parent=27 // pred_check_branch
          %393 = sbr.rel (%p391) target = $region40
        $region39: #{tpu_custom_call.1} parent=27 // pred_region
          %s395 = ssub.s32 256, 256
          %396 = vsyncadd %s387, %s395
          %s397 = smul.addr %s24, 128
          %s398 = scalar_lea.hbm %s2, %s397
          %s399 = sshll.u32 %s390, 4
          %s400 = int_to_ptr.vmem [resolvable:$true] %s399
          %405 = dma.vmem_to_hbm [thread:$0]  %s400, 256, %s398, %s387, 128, 256, 8
        $region40: #{tpu_custom_call.1} parent=27 // pred_fallthru
          _
      $region28: #{tpu_custom_call.1} parent=5 // pred_fallthru
        _
      %p406 = scmp.le.s32.totalorder 2, %s15
      // Predicated region
      $region41: #{tpu_custom_call.1} parent=5 // pred_check
        %p407 = pneg %p406
      $region42: #{tpu_custom_call.1} parent=5 // pred_check_branch
        %409 = sbr.rel (%p407) target = $region44
      $region43: #{tpu_custom_call.1} parent=5 // pred_region
        %s410 = ssub.s32 %s15, 2
        // Predicated region
        $region45: #{tpu_custom_call.1} parent=43 // pred_check
          %p411 = pneg %p108
        $region46: #{tpu_custom_call.1} parent=43 // pred_check_branch
          %413 = sbr.rel (%p411) target = $region48
        $region47: #{tpu_custom_call.1} parent=43 // pred_region
          %s414 = sand.u32 %s93, 1
          %s415 = scalar_lea.sflag [#allocation4], %s414
          %s416 = sand.u32 %s93, 1
          %s417 = smul.addr %s416, 16
          %s418 = scalar_lea.vmem [#allocation7], %s417
          %419 = dma.done %s415, 256
        $region48: #{tpu_custom_call.1} parent=43 // pred_fallthru
          _
      $region44: #{tpu_custom_call.1} parent=5 // pred_fallthru
        _
    $region6: #{tpu_custom_call.1} parent=1 // loop_footer
      %s19 = sadd.s32 1, %s15
    $region7: #{tpu_custom_call.1} parent=1 // loop_footer_branch
      %14 = sbr.rel target = $region3
    $region8: #{tpu_custom_call.1} parent=1 // loop_exit
      _
    %420 = vsyncpa [#allocation3], 1
    %s421 = scalar_lea.sflag [#allocation3], 1
    %422 = vsyncpa %s421, 1
    %423 = vsyncpa [#allocation6], 1
    %s424 = scalar_lea.sflag [#allocation6], 1
    %425 = vsyncpa %s424, 1
    %426 = vsyncpa [#allocation4], 1
    %s427 = scalar_lea.sflag [#allocation4], 1
    %428 = vsyncpa %s427, 1

// kernel: tpu_custom_call.1
$region0: #{tpu_custom_call.1}
  #allocation0 [shape = 'u32[]', space=smem, size = 0x4, offset = 0x4, fixed_abs, tag = 'smem constant byte address 0x4 - core index']
  #allocation1 [shape = 'u32[144,128]{1,0:T(1,128)}', space=vmem, size = 0x12000, scoped, tag = 'internal scratch']
  %s0 = inlined_call_operand.hbm [shape: f32[16,256], index: 0, kind: input, shape index: {}]
  %s1 = inlined_call_operand.hbm [shape: f32[256,512], index: 1, kind: input, shape index: {}]
  %s2 = inlined_call_operand.hbm [shape: f32[16,256], index: 2, kind: output, shape index: {}]
  %s3 = sld [smem:[#allocation0]]
  $region49: #{tpu_custom_call.1} parent=0
    _
  %s5 = ssub.s32 1, %s3
  %s6 = scalar_select 0, %s5, %s3
  $region1: #{tpu_custom_call.1} parent=0
    #allocation2 [shape = 'u8[16384]{0}', space=vmem, size = 0x4000, scoped, tag = 'input window, operand 0, single buffered']
    #allocation3 [shape = 's32[2]{0}', space=sflag, size = 0x8, scoped, tag = 'scoped memory for tpu_custom_call.1']
    #allocation4 [shape = 's32[2]{0}', space=sflag, size = 0x8, scoped, tag = 'scoped memory for tpu_custom_call.1']
    #allocation5 [shape = 'u8[524288]{0}', space=vmem, size = 0x80000, scoped, tag = 'input window, operand 1']
    #allocation6 [shape = 's32[2]{0}', space=sflag, size = 0x8, scoped, tag = 'scoped memory for tpu_custom_call.1']
    #allocation7 [shape = 'u8[16384]{0}', space=vmem, size = 0x4000, scoped, tag = 'output window, operand 0']
    %7 = vsyncpa [#allocation3], 0
    %8 = vsyncpa [#allocation6], 0
    %s9 = scalar_lea.sflag [#allocation6], 1
    %10 = vsyncpa %s9, 0
    %11 = vsyncpa [#allocation4], 0
    %s12 = scalar_lea.sflag [#allocation4], 1
    %13 = vsyncpa %s12, 0
    loop: start=0, step=1, limit=4
    $region2: #{tpu_custom_call.1} parent=1 // loop_pre_header
      _
    $region3: #{tpu_custom_call.1} parent=1 // loop_header
      %s15 = sphi 0, %s19
      %p16 = scmp.ge.s32.totalorder %s15, 4
      %s22 = sphi 0, %s34
      %s23 = sphi 0, %s30
      %s24 = sphi 0, %s22
      %s25 = sphi 0, %s23
      %s26 = sphi 0, %s24
      %s27 = sphi 0, %s25
      %s37 = sphi 0, %s39
      %s40 = sphi 0, %s37
      %s41 = sphi 0, %s40
      %s57 = sphi 0, %s41
      %s63 = sphi 0, %s65
      %s66 = sphi 0, %s63
      %s67 = sphi 0, %s66
      %s83 = sphi 0, %s67
      %s89 = sphi 0, %s91
      %s92 = sphi 0, %s89
      %s93 = sphi 0, %s92
      %s109 = sphi 0, %s93
    $region4: #{tpu_custom_call.1} parent=1 // loop_header_branch
      %18 = sbr.rel (%p16) target = $region8
    $region5: #{tpu_custom_call.1} parent=1 // loop_body
      %s20 = ssub.s32 %s15, 1
      %s21 = ssub.s32 %s15, 2
      %s28 = sadd.s32 1, %s23
      %p29 = scmp.ge.s32.totalorder %s28, 1
      %s30 = scalar_select %p29, 0, %s28
      %s31 = sadd.s32 1, %s22
      %s32 = scalar_select %p29, %s31, %s22
      %p33 = scmp.ge.s32.totalorder %s32, 2
      %s34 = scalar_select %p33, 0, %s32
      %s35 = ssub.s32 %s23, %s30
      %p36 = scmp.eq.s32.totalorder %s35, 0
      %s38 = sadd.s32 %s37, 1
      %s39 = scalar_select %p36, %s37, %s38
      %p42 = pneg %p36
      %p43 = scmp.eq.s32.totalorder %s15, 1
      %p44 = por %p42, %p43
      %p45 = scmp.ne.s32.totalorder %s37, %s40
      %p46 = scmp.eq.s32.totalorder %s15, 0
      %p47 = por %p45, %p46
      %p48 = scmp.ne.s32.totalorder %s37, %s40
      %p49 = scmp.eq.s32.totalorder %s20, 1
      %p50 = por %p48, %p49
      %p51 = scmp.ne.s32.totalorder %s40, %s41
      %p52 = scmp.eq.s32.totalorder %s20, 0
      %p53 = por %p51, %p52
      %p54 = scmp.ne.s32.totalorder %s40, %s41
      %p55 = scmp.eq.s32.totalorder %s21, 1
      %p56 = por %p54, %p55
      %p58 = scmp.ne.s32.totalorder %s41, %s57
      %p59 = scmp.eq.s32.totalorder %s21, 0
      %p60 = por %p58, %p59
      %s61 = ssub.s32 %s22, %s34
      %p62 = scmp.eq.s32.totalorder %s61, 0
      %s64 = sadd.s32 %s63, 1
      %s65 = scalar_select %p62, %s63, %s64
      %p68 = pneg %p62
      %p69 = scmp.eq.s32.totalorder %s15, 1
      %p70 = por %p68, %p69
      %p71 = scmp.ne.s32.totalorder %s63, %s66
      %p72 = scmp.eq.s32.totalorder %s15, 0
      %p73 = por %p71, %p72
      %p74 = scmp.ne.s32.totalorder %s63, %s66
      %p75 = scmp.eq.s32.totalorder %s20, 1
      %p76 = por %p74, %p75
      %p77 = scmp.ne.s32.totalorder %s66, %s67
      %p78 = scmp.eq.s32.totalorder %s20, 0
      %p79 = por %p77, %p78
      %p80 = scmp.ne.s32.totalorder %s66, %s67
      %p81 = scmp.eq.s32.totalorder %s21, 1
      %p82 = por %p80, %p81
      %p84 = scmp.ne.s32.totalorder %s67, %s83
      %p85 = scmp.eq.s32.totalorder %s21, 0
      %p86 = por %p84, %p85
      %s87 = ssub.s32 %s22, %s34
      %p88 = scmp.eq.s32.totalorder %s87, 0
      %s90 = sadd.s32 %s89, 1
      %s91 = scalar_select %p88, %s89, %s90
      %p94 = pneg %p88
      %p95 = scmp.eq.s32.totalorder %s15, 1
      %p96 = por %p94, %p95
      %p97 = scmp.ne.s32.totalorder %s89, %s92
      %p98 = scmp.eq.s32.totalorder %s15, 0
      %p99 = por %p97, %p98
      %p100 = scmp.ne.s32.totalorder %s89, %s92
      %p101 = scmp.eq.s32.totalorder %s20, 1
      %p102 = por %p100, %p101
      %p103 = scmp.ne.s32.totalorder %s92, %s93
      %p104 = scmp.eq.s32.totalorder %s20, 0
      %p105 = por %p103, %p104
      %p106 = scmp.ne.s32.totalorder %s92, %s93
      %p107 = scmp.eq.s32.totalorder %s21, 1
      %p108 = por %p106, %p107
      %p110 = scmp.ne.s32.totalorder %s93, %s109
      %p111 = scmp.eq.s32.totalorder %s21, 0
      %p112 = por %p110, %p111
      %p113 = scmp.le.s32.totalorder 1, %s15
      %p114 = scmp.lt.s32.totalorder %s15, 3
      %p115 = pnand %p113, %p114
      %p116 = pneg %p115
      // Predicated region
      $region9: #{tpu_custom_call.1} parent=5 // pred_check
        _
      $region10: #{tpu_custom_call.1} parent=5 // pred_check_branch
        %118 = sbr.rel (%p115) target = $region12
      $region11: #{tpu_custom_call.1} parent=5 // pred_region
        %s119 = ssub.s32 %s15, 1
        // Predicated region
        $region13: #{tpu_custom_call.1} parent=11 // pred_check
          %p120 = pneg %p53
        $region14: #{tpu_custom_call.1} parent=11 // pred_check_branch
          %122 = sbr.rel (%p120) target = $region16
        $region15: #{tpu_custom_call.1} parent=11 // pred_region
          %s123 = smul.u32 2, %s25
          %s125 = ssub.s32 512, 512
          %126 = vsyncadd [#allocation3], %s125
          %s127 = smul.addr %s123, 2
          %s128 = smul.addr %s127, 128
          %s129 = scalar_lea.hbm %s0, %s128
          %s130 = sshll.u32 [#allocation2], 4
          %s131 = int_to_ptr.vmem [resolvable:$true] %s130
          %136 = dma.hbm_to_vmem [thread:$0]  %s129, 512, %s131, [#allocation3], 256, 256, 16
        $region16: #{tpu_custom_call.1} parent=11 // pred_fallthru
          _
      $region12: #{tpu_custom_call.1} parent=5 // pred_fallthru
        _
      %p137 = scmp.lt.s32.totalorder %s15, 2
      // Predicated region
      $region17: #{tpu_custom_call.1} parent=5 // pred_check
        %p138 = pneg %p137
      $region18: #{tpu_custom_call.1} parent=5 // pred_check_branch
        %140 = sbr.rel (%p138) target = $region20
      $region19: #{tpu_custom_call.1} parent=5 // pred_region
        // Predicated region
        $region21: #{tpu_custom_call.1} parent=19 // pred_check
          %p141 = pneg %p73
        $region22: #{tpu_custom_call.1} parent=19 // pred_check_branch
          %143 = sbr.rel (%p141) target = $region24
        $region23: #{tpu_custom_call.1} parent=19 // pred_region
          %s144 = sand.u32 %s63, 1
          %s145 = scalar_lea.sflag [#allocation6], %s144
          %s146 = sand.u32 %s63, 1
          %s147 = smul.addr %s146, 512
          %s148 = scalar_lea.vmem [#allocation5], %s147
          %s149 = smul.u32 2, %s22
          %s151 = ssub.s32 8192, 8192
          %152 = vsyncadd %s145, %s151
          %s153 = smul.addr %s149, 128
          %s154 = scalar_lea.hbm %s1, %s153
          %s155 = sshll.u32 %s148, 4
          %s156 = int_to_ptr.vmem [resolvable:$true] %s155
          %161 = dma.hbm_to_vmem [thread:$0]  %s154, 8192, %s156, %s145, 512, 256, 16
        $region24: #{tpu_custom_call.1} parent=19 // pred_fallthru
          _
      $region20: #{tpu_custom_call.1} parent=5 // pred_fallthru
        _
      %p162 = scmp.le.s32.totalorder 1, %s15
      %p163 = scmp.lt.s32.totalorder %s15, 3
      %p164 = pnand %p162, %p163
      %p165 = pneg %p164
      // Predicated region
      $region25: #{tpu_custom_call.1} parent=5 // pred_check
        _
      $region26: #{tpu_custom_call.1} parent=5 // pred_check_branch
        %167 = sbr.rel (%p164) target = $region28
      $region27: #{tpu_custom_call.1} parent=5 // pred_region
        %s168 = ssub.s32 %s15, 1
        // Predicated region
        $region29: #{tpu_custom_call.1} parent=27 // pred_check
          %p169 = pneg %p53
        $region30: #{tpu_custom_call.1} parent=27 // pred_check_branch
          %171 = sbr.rel (%p169) target = $region32
        $region31: #{tpu_custom_call.1} parent=27 // pred_region
          %172 = dma.done [#allocation3], 512
        $region32: #{tpu_custom_call.1} parent=27 // pred_fallthru
          _
        %s173 = sand.u32 %s66, 1
        %s174 = scalar_lea.sflag [#allocation6], %s173
        %s175 = sand.u32 %s66, 1
        %s176 = smul.addr %s175, 512
        %s177 = scalar_lea.vmem [#allocation5], %s176
        // Predicated region
        $region33: #{tpu_custom_call.1} parent=27 // pred_check
          %p178 = pneg %p79
        $region34: #{tpu_custom_call.1} parent=27 // pred_check_branch
          %180 = sbr.rel (%p178) target = $region36
        $region35: #{tpu_custom_call.1} parent=27 // pred_region
          %181 = dma.done %s174, 8192
        $region36: #{tpu_custom_call.1} parent=27 // pred_fallthru
          _
        %p182 = pneg %p53
        %p183 = pneg %p50
        %s184 = sand.u32 %s66, 1
        %s185 = scalar_lea.sflag [#allocation6], %s184
        %s186 = sand.u32 %s66, 1
        %s187 = smul.addr %s186, 512
        %s188 = scalar_lea.vmem [#allocation5], %s187
        %p189 = pneg %p79
        %p190 = pneg %p76
        %p191 = pneg %p105
        %p192 = pneg %p102
        %s193 = sand.u32 %s92, 1
        %s194 = scalar_lea.sflag [#allocation4], %s193
        %s195 = sand.u32 %s92, 1
        %s196 = smul.addr %s195, 16
        %s197 = scalar_lea.vmem [#allocation7], %s196
        %s198 = smul.u32 2, %s25
        %s199 = smul.u32 2, %s24
        %v200 = vld [vmem:[#allocation2] sm:$0xff]
        %v201 = vld [vmem:[#allocation2 + $0x8] sm:$0xff]
        %v202 = vld [vmem:[#allocation2 + $0x10] sm:$0xff]
        %v203 = vld [vmem:[#allocation2 + $0x18] sm:$0xff]
        %v204 = vld [vmem:[%s177] sm:$0xff]
        %v205 = vld [vmem:[%s177 + $0x8] sm:$0xff]
        %v206 = vld [vmem:[%s177 + $0x10] sm:$0xff]
        %v207 = vld [vmem:[%s177 + $0x18] sm:$0xff]
        %v208 = vld [vmem:[%s177 + $0x20] sm:$0xff]
        %v209 = vld [vmem:[%s177 + $0x28] sm:$0xff]
        %v210 = vld [vmem:[%s177 + $0x30] sm:$0xff]
        %v211 = vld [vmem:[%s177 + $0x38] sm:$0xff]
        %v212 = vld [vmem:[%s177 + $0x40] sm:$0xff]
        %v213 = vld [vmem:[%s177 + $0x48] sm:$0xff]
        %v214 = vld [vmem:[%s177 + $0x50] sm:$0xff]
        %v215 = vld [vmem:[%s177 + $0x58] sm:$0xff]
        %v216 = vld [vmem:[%s177 + $0x60] sm:$0xff]
        %v217 = vld [vmem:[%s177 + $0x68] sm:$0xff]
        %v218 = vld [vmem:[%s177 + $0x70] sm:$0xff]
        %v219 = vld [vmem:[%s177 + $0x78] sm:$0xff]
        %v220 = vld [vmem:[%s177 + $0x80] sm:$0xff]
        %v221 = vld [vmem:[%s177 + $0x88] sm:$0xff]
        %v222 = vld [vmem:[%s177 + $0x90] sm:$0xff]
        %v223 = vld [vmem:[%s177 + $0x98] sm:$0xff]
        %v224 = vld [vmem:[%s177 + $0xa0] sm:$0xff]
        %v225 = vld [vmem:[%s177 + $0xa8] sm:$0xff]
        %v226 = vld [vmem:[%s177 + $0xb0] sm:$0xff]
        %v227 = vld [vmem:[%s177 + $0xb8] sm:$0xff]
        %v228 = vld [vmem:[%s177 + $0xc0] sm:$0xff]
        %v229 = vld [vmem:[%s177 + $0xc8] sm:$0xff]
        %v230 = vld [vmem:[%s177 + $0xd0] sm:$0xff]
        %v231 = vld [vmem:[%s177 + $0xd8] sm:$0xff]
        %v232 = vld [vmem:[%s177 + $0xe0] sm:$0xff]
        %v233 = vld [vmem:[%s177 + $0xe8] sm:$0xff]
        %v234 = vld [vmem:[%s177 + $0xf0] sm:$0xff]
        %v235 = vld [vmem:[%s177 + $0xf8] sm:$0xff]
        %v236 = vld [vmem:[%s177 + $0x100] sm:$0xff]
        %v237 = vld [vmem:[%s177 + $0x108] sm:$0xff]
        %v238 = vld [vmem:[%s177 + $0x110] sm:$0xff]
        %v239 = vld [vmem:[%s177 + $0x118] sm:$0xff]
        %v240 = vld [vmem:[%s177 + $0x120] sm:$0xff]
        %v241 = vld [vmem:[%s177 + $0x128] sm:$0xff]
        %v242 = vld [vmem:[%s177 + $0x130] sm:$0xff]
        %v243 = vld [vmem:[%s177 + $0x138] sm:$0xff]
        %v244 = vld [vmem:[%s177 + $0x140] sm:$0xff]
        %v245 = vld [vmem:[%s177 + $0x148] sm:$0xff]
        %v246 = vld [vmem:[%s177 + $0x150] sm:$0xff]
        %v247 = vld [vmem:[%s177 + $0x158] sm:$0xff]
        %v248 = vld [vmem:[%s177 + $0x160] sm:$0xff]
        %v249 = vld [vmem:[%s177 + $0x168] sm:$0xff]
        %v250 = vld [vmem:[%s177 + $0x170] sm:$0xff]
        %v251 = vld [vmem:[%s177 + $0x178] sm:$0xff]
        %v252 = vld [vmem:[%s177 + $0x180] sm:$0xff]
        %v253 = vld [vmem:[%s177 + $0x188] sm:$0xff]
        %v254 = vld [vmem:[%s177 + $0x190] sm:$0xff]
        %v255 = vld [vmem:[%s177 + $0x198] sm:$0xff]
        %v256 = vld [vmem:[%s177 + $0x1a0] sm:$0xff]
        %v257 = vld [vmem:[%s177 + $0x1a8] sm:$0xff]
        %v258 = vld [vmem:[%s177 + $0x1b0] sm:$0xff]
        %v259 = vld [vmem:[%s177 + $0x1b8] sm:$0xff]
        %v260 = vld [vmem:[%s177 + $0x1c0] sm:$0xff]
        %v261 = vld [vmem:[%s177 + $0x1c8] sm:$0xff]
        %v262 = vld [vmem:[%s177 + $0x1d0] sm:$0xff]
        %v263 = vld [vmem:[%s177 + $0x1d8] sm:$0xff]
        %v264 = vld [vmem:[%s177 + $0x1e0] sm:$0xff]
        %v265 = vld [vmem:[%s177 + $0x1e8] sm:$0xff]
        %v266 = vld [vmem:[%s177 + $0x1f0] sm:$0xff]
        %v267 = vld [vmem:[%s177 + $0x1f8] sm:$0xff]
        %268 = vmatprep.subr.mxu0 %v205
        %269 = vmatpush1.msra.mxu0 %v204
        %270 = vmatprep.subr.mxu0 %v207
        %271 = vmatpush1.msra.mxu0 %v206
        %272 = vmatprep.subr.mxu0 %v209
        %273 = vmatpush1.msra.mxu0 %v208
        %274 = vmatprep.subr.mxu0 %v211
        %275 = vmatpush1.msra.mxu0 %v210
        %276 = vmatprep.subr.mxu0 %v213
        %277 = vmatpush1.msra.mxu0 %v212
        %278 = vmatprep.subr.mxu0 %v215
        %279 = vmatpush1.msra.mxu0 %v214
        %280 = vmatprep.subr.mxu0 %v217
        %281 = vmatpush1.msra.mxu0 %v216
        %282 = vmatprep.subr.mxu0 %v219
        %283 = vmatpush1.msra.mxu0 %v218
        %284 = vmatprep.subr.mxu0 %v221
        %285 = vmatpush1.msra.mxu0 %v220
        %286 = vmatprep.subr.mxu0 %v223
        %287 = vmatpush1.msra.mxu0 %v222
        %288 = vmatprep.subr.mxu0 %v225
        %289 = vmatpush1.msra.mxu0 %v224
        %290 = vmatprep.subr.mxu0 %v227
        %291 = vmatpush1.msra.mxu0 %v226
        %292 = vmatprep.subr.mxu0 %v229
        %293 = vmatpush1.msra.mxu0 %v228
        %294 = vmatprep.subr.mxu0 %v231
        %295 = vmatpush1.msra.mxu0 %v230
        %296 = vmatprep.subr.mxu0 %v233
        %297 = vmatpush1.msra.mxu0 %v232
        %298 = vmatprep.subr.mxu0 %v235
        %299 = vmatpush1.msra.mxu0 %v234
        %300 = vmatprep.subr.mxu0 %v237
        %301 = vmatpush1.msra.mxu0 %v236
        %302 = vmatprep.subr.mxu0 %v239
        %303 = vmatpush1.msra.mxu0 %v238
        %304 = vmatprep.subr.mxu0 %v241
        %305 = vmatpush1.msra.mxu0 %v240
        %306 = vmatprep.subr.mxu0 %v243
        %307 = vmatpush1.msra.mxu0 %v242
        %308 = vmatprep.subr.mxu0 %v245
        %309 = vmatpush1.msra.mxu0 %v244
        %310 = vmatprep.subr.mxu0 %v247
        %311 = vmatpush1.msra.mxu0 %v246
        %312 = vmatprep.subr.mxu0 %v249
        %313 = vmatpush1.msra.mxu0 %v248
        %314 = vmatprep.subr.mxu0 %v251
        %315 = vmatpush1.msra.mxu0 %v250
        %316 = vmatprep.subr.mxu0 %v253
        %317 = vmatpush1.msra.mxu0 %v252
        %318 = vmatprep.subr.mxu0 %v255
        %319 = vmatpush1.msra.mxu0 %v254
        %320 = vmatprep.subr.mxu0 %v257
        %321 = vmatpush1.msra.mxu0 %v256
        %322 = vmatprep.subr.mxu0 %v259
        %323 = vmatpush1.msra.mxu0 %v258
        %324 = vmatprep.subr.mxu0 %v261
        %325 = vmatpush1.msra.mxu0 %v260
        %326 = vmatprep.subr.mxu0 %v263
        %327 = vmatpush1.msra.mxu0 %v262
        %328 = vmatprep.subr.mxu0 %v265
        %329 = vmatpush1.msra.mxu0 %v264
        %330 = vmatprep.subr.mxu0 %v267
        %331 = vmatpush1.msra.mxu0 %v266
        %332 = vmatprep.mubr.f32.mxu0 %v201
        %333 = vmatmul.mubr.f32.gmra.mrb[0].mxu0 %v200
        %v334 = vpop.f32.mrb[0].mxu0
        %v335 = vadd.f32 0.0, %v334
        %v336 = vpop.f32.mrb[0].mxu0
        %v337 = vadd.f32 0.0, %v336
        %338 = vmatprep.mubr.f32.mxu0 %v203
        %339 = vmatmul.mubr.f32.gmra.mrb[0].mxu0 %v202
        %v340 = vpop.f32.mrb[0].mxu0
        %v341 = vadd.f32 0.0, %v340
        %v342 = vpop.f32.mrb[0].mxu0
        %v343 = vadd.f32 0.0, %v342
        %344 = vdwg.mxu0
        %v345 = vadd.f32 %v335, %v337
        %v346 = vadd.f32 %v341, %v343
        %s347 = smul.u32 %s24, 128
        %s348 = sshra.s32 %s347, 7
        %s349 = sand.u32 %s347, 127
        %s350 = smul.addr %s348, 8
        %s351 = scalar_lea.vmem [#allocation2], %s350
        %v352 = vld [vmem:[%s351] sm:$0xff]
        %v353 = vld [vmem:[%s351 + $0x10] sm:$0xff]
        %v354 = vmul.f32 %v352, %v352
        %v355 = vmul.f32 %v353, %v353
        %v356 = vadd.f32 %v354, %v355
        %v357 = vrot.slane %v356, 4
        %v358 = vadd.f32 %v356, %v357
        %v359 = vrot.slane %v358, 2
        %v360 = vadd.f32 %v358, %v359
        %v361 = vrot.slane %v360, 1
        %v362 = vadd.f32 %v360, %v361
        %v363 = vmul.f32 %v345, %v345
        %v364 = vmul.f32 %v346, %v346
        %v365 = vadd.f32 %v363, %v364
        %v366 = vrot.slane %v365, 4
        %v367 = vadd.f32 %v365, %v366
        %v368 = vrot.slane %v367, 2
        %v369 = vadd.f32 %v367, %v368
        %v370 = vrot.slane %v369, 1
        %v371 = vadd.f32 %v369, %v370
        %v372 = vrsqrt.pop %v362
        %v373 = vmul.f32 %v362, %v372
        %vm374 = vcmp.eq.f32.partialorder %v362, inf
        %v375 = vsel %vm374, %v362, %v373
        %vm376 = vcmp.eq.f32.partialorder %v362, 0.0
        %v377 = vand.u32 %v362, 2147483648
        %v378 = vsel %vm376, %v377, %v375
        %v379 = vadd.f32 %v371, 1e-12
        %v380 = vrsqrt.pop %v379
        %v381 = vmul.f32 %v378, %v380
        %v382 = vmul.f32 %v345, %v381
        %v383 = vmul.f32 %v346, %v381
        %384 = vst [vmem:[%s197] sm:$0xff] %v382
        %385 = vst [vmem:[%s197 + $0x8] sm:$0xff] %v383
        %s386 = sand.u32 %s92, 1
        %s387 = scalar_lea.sflag [#allocation4], %s386
        %s388 = sand.u32 %s92, 1
        %s389 = smul.addr %s388, 16
        %s390 = scalar_lea.vmem [#allocation7], %s389
        // Predicated region
        $region37: #{tpu_custom_call.1} parent=27 // pred_check
          %p391 = pneg %p102
        $region38: #{tpu_custom_call.1} parent=27 // pred_check_branch
          %393 = sbr.rel (%p391) target = $region40
        $region39: #{tpu_custom_call.1} parent=27 // pred_region
          %s395 = ssub.s32 256, 256
          %396 = vsyncadd %s387, %s395
          %s397 = smul.addr %s24, 128
          %s398 = scalar_lea.hbm %s2, %s397
          %s399 = sshll.u32 %s390, 4
          %s400 = int_to_ptr.vmem [resolvable:$true] %s399
          %405 = dma.vmem_to_hbm [thread:$0]  %s400, 256, %s398, %s387, 128, 256, 8
        $region40: #{tpu_custom_call.1} parent=27 // pred_fallthru
          _
      $region28: #{tpu_custom_call.1} parent=5 // pred_fallthru
        _
      %p406 = scmp.le.s32.totalorder 2, %s15
      // Predicated region
      $region41: #{tpu_custom_call.1} parent=5 // pred_check
        %p407 = pneg %p406
      $region42: #{tpu_custom_call.1} parent=5 // pred_check_branch
        %409 = sbr.rel (%p407) target = $region44
      $region43: #{tpu_custom_call.1} parent=5 // pred_region
        %s410 = ssub.s32 %s15, 2
        // Predicated region
        $region45: #{tpu_custom_call.1} parent=43 // pred_check
          %p411 = pneg %p108
        $region46: #{tpu_custom_call.1} parent=43 // pred_check_branch
          %413 = sbr.rel (%p411) target = $region48
        $region47: #{tpu_custom_call.1} parent=43 // pred_region
          %s414 = sand.u32 %s93, 1
          %s415 = scalar_lea.sflag [#allocation4], %s414
          %s416 = sand.u32 %s93, 1
          %s417 = smul.addr %s416, 16
          %s418 = scalar_lea.vmem [#allocation7], %s417
          %419 = dma.done %s415, 256
        $region48: #{tpu_custom_call.1} parent=43 // pred_fallthru
          _
      $region44: #{tpu_custom_call.1} parent=5 // pred_fallthru
        _
    $region6: #{tpu_custom_call.1} parent=1 // loop_footer
      %s19 = sadd.s32 1, %s15
    $region7: #{tpu_custom_call.1} parent=1 // loop_footer_branch
      %14 = sbr.rel target = $region3
    $region8: #{tpu_custom_call.1} parent=1 // loop_exit
      _
    %420 = vsyncpa [#allocation3], 1
    %s421 = scalar_lea.sflag [#allocation3], 1
    %422 = vsyncpa %s421, 1
    %423 = vsyncpa [#allocation6], 1
    %s424 = scalar_lea.sflag [#allocation6], 1
    %425 = vsyncpa %s424, 1
    %426 = vsyncpa [#allocation4], 1
    %s427 = scalar_lea.sflag [#allocation4], 1
    %428 = vsyncpa %s427, 1

</llo_original>
